<compile_context>
chip_gen: v5e
topology: v5e:2x2
jax: 0.10.0
libtpu: 0.0.40
codegen_flags: <defaults>
</compile_context>

<pallas_src>
import functools

import jax
import jax.numpy as jnp
from jax import lax
from jax.experimental import pallas as pl
from jax.experimental.pallas import tpu as pltpu


def _round_up(n, m):
    return (n + m - 1) // m * m


def _vmem_capacity_bytes():
    """Generation-aware VMEM capacity; conservative (v7x, 64 MiB) fallback."""
    try:
        info = pltpu.get_tpu_info()
        cap = getattr(info, "vmem_capacity_bytes", None)
        if cap:
            return int(cap)
    except Exception:
        pass
    return 64 << 20


def _autoencoder_kernel(x_ref, w_ref, b_enc_ref, b_dec_ref, out_ref):
    x = x_ref[...]            # (TB, D)  bfloat16
    w = w_ref[...]            # (P, D)   bfloat16  (resident, single-buffered)
    b_enc = b_enc_ref[...]    # (1, P)   float32
    b_dec = b_dec_ref[...]    # (1, D)   float32

    # encode: relu(x @ w.T + b_enc)
    # NT dimension numbers (contract both operands' last dim) -> MXU native
    # transposed-RHS matmul; no per-step XLU/vreg transpose of (P, D) weight.
    h = lax.dot_general(
        x, w,
        dimension_numbers=(((1,), (1,)), ((), ())),
        preferred_element_type=jnp.float32,
    )
    h = jnp.maximum(h + b_enc, 0.0)                      # f32 elementwise (VPU)

    # decode: sigmoid(h @ w + b_dec), plain NN matmul, f32 accumulation.
    y = lax.dot_general(
        h.astype(jnp.bfloat16), w,
        dimension_numbers=(((1,), (0,)), ((), ())),
        preferred_element_type=jnp.float32,
    )
    # sigmoid = 1 / (1 + exp(-z)) with both exp and reciprocal on the EUP slot.
    sig = pl.reciprocal(1.0 + jnp.exp(-(y + b_dec)), approx=True)
    out_ref[...] = sig.astype(out_ref.dtype)


def prepare_params(w, b_enc, b_dec):
    """Pad/cast the call-invariant parameters ONCE (outside the per-call jit).

    w: (P, D) f32 -> (P_p, D_p) bf16; biases -> f32 rows (1, P_p)/(1, D_p).
    """
    P, D = w.shape
    P_p = _round_up(P, 128)
    D_p = _round_up(D, 128)

    w16 = w.astype(jnp.bfloat16)
    if (P_p, D_p) != (P, D):
        w16 = jnp.pad(w16, ((0, P_p - P), (0, D_p - D)))

    be = b_enc.astype(jnp.float32)
    if P_p != P:
        be = jnp.pad(be, (0, P_p - P))
    bd = b_dec.astype(jnp.float32)
    if D_p != D:
        bd = jnp.pad(bd, (0, D_p - D))

    return w16, be.reshape(1, P_p), bd.reshape(1, D_p)


@functools.partial(jax.jit, static_argnames=("batch_tile", "out_dtype"))
def autoencoder_forward(x, w_p, b_enc_p, b_dec_p, *, batch_tile=512,
                        out_dtype=jnp.bfloat16):
    """x: (B, D) f32/bf16; prepared params from prepare_params(). -> (B, D)."""
    B, D = x.shape
    P_p, D_p = w_p.shape
    assert b_enc_p.shape == (1, P_p) and b_dec_p.shape == (1, D_p)
    assert D <= D_p

    # Batch tile: multiple of 16 (bf16 sublane packing); small batches collapse
    # to a single grid step, large batches amortize per-step overhead at ~512.
    B16 = _round_up(B, 16)
    bt = min(_round_up(batch_tile, 16), B16)
    B_p = _round_up(B16, bt)

    # Aligned path is a pure dtype cast (no extra HBM materialization); pad
    # only when the shapes actually require it.
    x16 = x.astype(jnp.bfloat16)
    if (B_p, D_p) != (B, D):
        x16 = jnp.pad(x16, ((0, B_p - B), (0, D_p - D)))

    out_bytes = jnp.dtype(out_dtype).itemsize
    vmem_bytes = (
        2 * bt * D_p * 2             # x tile, bf16, double-buffered
        + P_p * D_p * 2              # weight, bf16, single-buffered (resident)
        + (P_p + D_p) * 4            # biases, f32, single-buffered
        + 2 * bt * D_p * out_bytes   # out tile, double-buffered
        + bt * P_p * 4               # h intermediate (f32)
        + bt * D_p * 4               # y/sigmoid intermediate (f32)
    )
    cap = _vmem_capacity_bytes()
    # ~3/4 of physical VMEM: ~48 MiB on v7x, ~96 MiB on v5e/v6e.
    vmem_limit = int(min(max(2 * vmem_bytes, 32 << 20), (cap * 3) // 4))

    cost = pl.CostEstimate(
        flops=4 * B_p * D_p * P_p,                 # two matmuls: 2 * (2*B*D*P)
        transcendentals=2 * B_p * D_p,             # exp + approx reciprocal
        bytes_accessed=(x16.size * 2 + w_p.size * 2
                        + b_enc_p.size * 4 + b_dec_p.size * 4
                        + B_p * D_p * out_bytes),
    )

    # Constant index_map -> double-buffering buys nothing; single-buffer.
    resident = pl.Buffered(1) if hasattr(pl, "Buffered") else None

    out = pl.pallas_call(
        _autoencoder_kernel,
        out_shape=jax.ShapeDtypeStruct((B_p, D_p), out_dtype),
        grid_spec=pltpu.PrefetchScalarGridSpec(
            num_scalar_prefetch=0,
            grid=(B_p // bt,),
            in_specs=[
                pl.BlockSpec((bt, D_p), lambda i: (i, 0)),        # x batch tile
                pl.BlockSpec((P_p, D_p), lambda i: (0, 0),
                             pipeline_mode=resident),              # weight
                pl.BlockSpec((1, P_p), lambda i: (0, 0),
                             pipeline_mode=resident),              # b_enc
                pl.BlockSpec((1, D_p), lambda i: (0, 0),
                             pipeline_mode=resident),              # b_dec
            ],
            out_specs=pl.BlockSpec((bt, D_p), lambda i: (i, 0)),
        ),
        compiler_params=pltpu.CompilerParams(
            dimension_semantics=("parallel",),   # shard batch tiles across TCs
            vmem_limit_bytes=vmem_limit,
        ),
        cost_estimate=cost,
    )(x16, w_p, b_enc_p, b_dec_p)

    return out[:B, :D]


def reference_forward(x, w, b_enc, b_dec):
    x = x.astype(jnp.float32)
    w = w.astype(jnp.float32)
    h = jnp.maximum(x @ w.T + b_enc, 0.0)
    return jax.nn.sigmoid(h @ w + b_dec)


if __name__ == "__main__":
    # Shapes consistent with the module: inputShape=256, projectionShape=128.
    B, D_IN, D_PROJ = 256, 256, 128

    key = jax.random.PRNGKey(0)
    kx, kw, kbe, kbd = jax.random.split(key, 4)

    x = jax.random.normal(kx, (B, D_IN), dtype=jnp.float32)
    # PyTorch __init__ zero-inits w (trivially constant output); use small
    # deterministic values so the kernel path is exercised. Biases ~ torch.rand.
    w = 0.05 * jax.random.normal(kw, (D_PROJ, D_IN), dtype=jnp.float32)
    b_enc = jax.random.uniform(kbe, (D_PROJ,), dtype=jnp.float32)
    b_dec = jax.random.uniform(kbd, (D_IN,), dtype=jnp.float32)

    # Pad/cast weights once (call-invariant), then run the fused forward.
    w_p, b_enc_p, b_dec_p = prepare_params(w, b_enc, b_dec)
    out = autoencoder_forward(x, w_p, b_enc_p, b_dec_p)
    out = jax.block_until_ready(out)

    ref = reference_forward(x, w, b_enc, b_dec)
    assert out.shape == (B, D_IN)
    assert out.dtype == jnp.bfloat16
    # bf16 operands/output with f32 accumulation (documented tradeoff) ->
    # loosened tolerance vs the f32 reference.
    assert jnp.allclose(out.astype(jnp.float32), ref, atol=2e-2, rtol=2e-2), \
        "mismatch vs reference"

    print("KERNEL_OK")
</pallas_src>

<mosaic_0001>
module attributes {stable_mosaic.version = 11 : i64} {
  func.func @_autoencoder_kernel(%arg0: i32, %arg1: memref<256x256xbf16, #tpu.memory_space<vmem>>, %arg2: memref<128x256xbf16, #tpu.memory_space<vmem>>, %arg3: memref<1x128xf32, #tpu.memory_space<vmem>>, %arg4: memref<1x256xf32, #tpu.memory_space<vmem>>, %arg5: memref<256x256xbf16, #tpu.memory_space<vmem>>) attributes {dimension_semantics = [#tpu.dimension_semantics<parallel>], iteration_bounds = array<i64: 1>, scalar_prefetch = 0 : i64, scratch_operands = 0 : i64, tpu.core_type = #tpu.core_type<tc>, window_params = [{transform_indices = @transform_0, window_bounds = array<i64: 256, 256>}, {pipeline_mode = #tpu.pipeline_mode<synchronous>, transform_indices = @transform_1, window_bounds = array<i64: 128, 256>}, {pipeline_mode = #tpu.pipeline_mode<synchronous>, transform_indices = @transform_2, window_bounds = array<i64: 1, 128>}, {pipeline_mode = #tpu.pipeline_mode<synchronous>, transform_indices = @transform_3, window_bounds = array<i64: 1, 256>}, {transform_indices = @transform_4, window_bounds = array<i64: 256, 256>}]} {
    %c0 = arith.constant 0 : index
    %c0_0 = arith.constant 0 : index
    %0 = vector.load %arg1[%c0, %c0_0] : memref<256x256xbf16, #tpu.memory_space<vmem>>, vector<256x256xbf16>
    %c0_1 = arith.constant 0 : index
    %c0_2 = arith.constant 0 : index
    %1 = vector.load %arg2[%c0_1, %c0_2] : memref<128x256xbf16, #tpu.memory_space<vmem>>, vector<128x256xbf16>
    %c0_3 = arith.constant 0 : index
    %c0_4 = arith.constant 0 : index
    %2 = vector.load %arg3[%c0_3, %c0_4] : memref<1x128xf32, #tpu.memory_space<vmem>>, vector<1x128xf32>
    %c0_5 = arith.constant 0 : index
    %c0_6 = arith.constant 0 : index
    %3 = vector.load %arg4[%c0_5, %c0_6] : memref<1x256xf32, #tpu.memory_space<vmem>>, vector<1x256xf32>
    %cst = arith.constant dense<0.000000e+00> : vector<256x128xf32>
    %4 = tpu.matmul %0, %1, %cst {dimension_numbers = #tpu.dot_dimension_numbers<[1], [1], [0], [0], [0, 0, 1, 0], [], []>} : vector<256x256xbf16>, vector<128x256xbf16>, vector<256x128xf32> -> vector<256x128xf32>
    %5 = vector.broadcast %2 : vector<1x128xf32> to vector<256x128xf32>
    %6 = arith.addf %4, %5 : vector<256x128xf32>
    %cst_7 = arith.constant 0.000000e+00 : f32
    %7 = vector.broadcast %cst_7 : f32 to vector<256x128xf32>
    %8 = arith.maximumf %6, %7 : vector<256x128xf32>
    %9 = arith.truncf %8 : vector<256x128xf32> to vector<256x128xbf16>
    %cst_8 = arith.constant dense<0.000000e+00> : vector<256x256xf32>
    %10 = tpu.matmul %9, %1, %cst_8 {dimension_numbers = #tpu.dot_dimension_numbers<[1], [0], [0], [1], [0, 0, 1, 1], [], []>} : vector<256x128xbf16>, vector<128x256xbf16>, vector<256x256xf32> -> vector<256x256xf32>
    %11 = vector.broadcast %3 : vector<1x256xf32> to vector<256x256xf32>
    %12 = arith.addf %10, %11 : vector<256x256xf32>
    %cst_9 = arith.constant 0.000000e+00 : f32
    %13 = vector.broadcast %cst_9 : f32 to vector<256x256xf32>
    %14 = arith.subf %13, %12 : vector<256x256xf32>
    %15 = math.exp %14 : vector<256x256xf32>
    %cst_10 = arith.constant 1.000000e+00 : f32
    %16 = vector.broadcast %cst_10 : f32 to vector<256x256xf32>
    %17 = arith.addf %16, %15 : vector<256x256xf32>
    %18 = tpu.reciprocal %17 {approx = true} : vector<256x256xf32> -> vector<256x256xf32>
    %19 = arith.truncf %18 : vector<256x256xf32> to vector<256x256xbf16>
    %c0_11 = arith.constant 0 : index
    %c0_12 = arith.constant 0 : index
    %20 = vector.load %arg5[%c0_11, %c0_12] : memref<256x256xbf16, #tpu.memory_space<vmem>>, vector<256x256xbf16>
    tpu.vector_store %arg5[%c0_11, %c0_12], %19 {strides = array<i32>} : memref<256x256xbf16, #tpu.memory_space<vmem>>, vector<256x256xbf16>,
    return
  }
  func.func @transform_0(%arg0: i32) -> (i32, i32) {
    %c0_i32 = arith.constant 0 : i32
    %c0_i32_0 = arith.constant 0 : i32
    return %arg0, %c0_i32 : i32, i32
  }
  func.func @transform_1(%arg0: i32) -> (i32, i32) {
    %c0_i32 = arith.constant 0 : i32
    %c0_i32_0 = arith.constant 0 : i32
    %c0_i32_1 = arith.constant 0 : i32
    return %c0_i32, %c0_i32_0 : i32, i32
  }
  func.func @transform_2(%arg0: i32) -> (i32, i32) {
    %c0_i32 = arith.constant 0 : i32
    %c0_i32_0 = arith.constant 0 : i32
    %c0_i32_1 = arith.constant 0 : i32
    return %c0_i32, %c0_i32_0 : i32, i32
  }
  func.func @transform_3(%arg0: i32) -> (i32, i32) {
    %c0_i32 = arith.constant 0 : i32
    %c0_i32_0 = arith.constant 0 : i32
    %c0_i32_1 = arith.constant 0 : i32
    return %c0_i32, %c0_i32_0 : i32, i32
  }
  func.func @transform_4(%arg0: i32) -> (i32, i32) {
    %c0_i32 = arith.constant 0 : i32
    %c0_i32_0 = arith.constant 0 : i32
    return %arg0, %c0_i32 : i32, i32
  }
}

</mosaic_0001>

<llo_original>
// kernel: autoencoder_forward.1
$region0: #{autoencoder_forward.1}
  #allocation0 [shape = 'u32[]', space=smem, size = 0x4, offset = 0x4, fixed_abs, tag = 'smem constant byte address 0x4 - core index']
  #allocation1 [shape = 'u32[72,128]{1,0:T(1,128)}', space=vmem, size = 0x9000, scoped, tag = 'internal scratch']
  %s0 = inlined_call_operand.vmem [shape: bf16[256,256], index: 0, kind: input, shape index: {}]
  %s1 = inlined_call_operand.vmem [shape: bf16[128,256], index: 1, kind: input, shape index: {}]
  %s2 = inlined_call_operand.vmem [shape: f32[1,128], index: 2, kind: input, shape index: {}]
  %s3 = inlined_call_operand.vmem [shape: f32[1,256], index: 3, kind: input, shape index: {}]
  %s4 = inlined_call_operand.hbm [shape: bf16[256,256], index: 4, kind: output, shape index: {}]
  %s5 = sld [smem:[#allocation0]]
  $region26: #{autoencoder_forward.1} parent=0
    _
  %s7 = ssub.s32 1, %s5
  %s8 = scalar_select 0, %s7, %s5
  $region1: #{autoencoder_forward.1} parent=0
    #allocation2 [shape = 'u8[131072]{0}', space=vmem, size = 0x20000, scoped, tag = 'output window, operand 0, single buffered']
    #allocation3 [shape = 's32[1]{0}', space=sflag, size = 0x4, scoped, tag = 'scoped memory for autoencoder_forward.1']
    %9 = vsyncpa [#allocation3], 0
    // Predicated region
    $region2: #{autoencoder_forward.1} parent=1 // pred_check
      _
    $region3: #{autoencoder_forward.1} parent=1 // pred_check_branch
      %11 = sbr.rel (0) target = $region5
    $region4: #{autoencoder_forward.1} parent=1 // pred_region
      _
    $region5: #{autoencoder_forward.1} parent=1 // pred_fallthru
      _
    // Predicated region
    $region6: #{autoencoder_forward.1} parent=1 // pred_check
      _
    $region7: #{autoencoder_forward.1} parent=1 // pred_check_branch
      %13 = sbr.rel (0) target = $region9
    $region8: #{autoencoder_forward.1} parent=1 // pred_region
      _
    $region9: #{autoencoder_forward.1} parent=1 // pred_fallthru
      _
    // Predicated region
    $region10: #{autoencoder_forward.1} parent=1 // pred_check
      _
    $region11: #{autoencoder_forward.1} parent=1 // pred_check_branch
      %15 = sbr.rel (0) target = $region13
    $region12: #{autoencoder_forward.1} parent=1 // pred_region
      _
    $region13: #{autoencoder_forward.1} parent=1 // pred_fallthru
      _
    // Predicated region
    $region14: #{autoencoder_forward.1} parent=1 // pred_check
      _
    $region15: #{autoencoder_forward.1} parent=1 // pred_check_branch
      %17 = sbr.rel (0) target = $region17
    $region16: #{autoencoder_forward.1} parent=1 // pred_region
      _
    $region17: #{autoencoder_forward.1} parent=1 // pred_fallthru
      _
    %v18 = vld [vmem:[%s0] sm:$0xff]
    %v19 = vld [vmem:[%s0 + $0x8] sm:$0xff]
    %v20 = vld [vmem:[%s0 + $0x10] sm:$0xff]
    %v21 = vld [vmem:[%s0 + $0x18] sm:$0xff]
    %v22 = vld [vmem:[%s0 + $0x20] sm:$0xff]
    %v23 = vld [vmem:[%s0 + $0x28] sm:$0xff]
    %v24 = vld [vmem:[%s0 + $0x30] sm:$0xff]
    %v25 = vld [vmem:[%s0 + $0x38] sm:$0xff]
    %v26 = vld [vmem:[%s0 + $0x40] sm:$0xff]
    %v27 = vld [vmem:[%s0 + $0x48] sm:$0xff]
    %v28 = vld [vmem:[%s0 + $0x50] sm:$0xff]
    %v29 = vld [vmem:[%s0 + $0x58] sm:$0xff]
    %v30 = vld [vmem:[%s0 + $0x60] sm:$0xff]
    %v31 = vld [vmem:[%s0 + $0x68] sm:$0xff]
    %v32 = vld [vmem:[%s0 + $0x70] sm:$0xff]
    %v33 = vld [vmem:[%s0 + $0x78] sm:$0xff]
    %v34 = vld [vmem:[%s0 + $0x80] sm:$0xff]
    %v35 = vld [vmem:[%s0 + $0x88] sm:$0xff]
    %v36 = vld [vmem:[%s0 + $0x90] sm:$0xff]
    %v37 = vld [vmem:[%s0 + $0x98] sm:$0xff]
    %v38 = vld [vmem:[%s0 + $0xa0] sm:$0xff]
    %v39 = vld [vmem:[%s0 + $0xa8] sm:$0xff]
    %v40 = vld [vmem:[%s0 + $0xb0] sm:$0xff]
    %v41 = vld [vmem:[%s0 + $0xb8] sm:$0xff]
    %v42 = vld [vmem:[%s0 + $0xc0] sm:$0xff]
    %v43 = vld [vmem:[%s0 + $0xc8] sm:$0xff]
    %v44 = vld [vmem:[%s0 + $0xd0] sm:$0xff]
    %v45 = vld [vmem:[%s0 + $0xd8] sm:$0xff]
    %v46 = vld [vmem:[%s0 + $0xe0] sm:$0xff]
    %v47 = vld [vmem:[%s0 + $0xe8] sm:$0xff]
    %v48 = vld [vmem:[%s0 + $0xf0] sm:$0xff]
    %v49 = vld [vmem:[%s0 + $0xf8] sm:$0xff]
    %v50 = vld [vmem:[%s1] sm:$0xff]
    %v51 = vld [vmem:[%s1 + $0x8] sm:$0xff]
    %v52 = vld [vmem:[%s1 + $0x10] sm:$0xff]
    %v53 = vld [vmem:[%s1 + $0x18] sm:$0xff]
    %v54 = vld [vmem:[%s1 + $0x20] sm:$0xff]
    %v55 = vld [vmem:[%s1 + $0x28] sm:$0xff]
    %v56 = vld [vmem:[%s1 + $0x30] sm:$0xff]
    %v57 = vld [vmem:[%s1 + $0x38] sm:$0xff]
    %v58 = vld [vmem:[%s1 + $0x40] sm:$0xff]
    %v59 = vld [vmem:[%s1 + $0x48] sm:$0xff]
    %v60 = vld [vmem:[%s1 + $0x50] sm:$0xff]
    %v61 = vld [vmem:[%s1 + $0x58] sm:$0xff]
    %v62 = vld [vmem:[%s1 + $0x60] sm:$0xff]
    %v63 = vld [vmem:[%s1 + $0x68] sm:$0xff]
    %v64 = vld [vmem:[%s1 + $0x70] sm:$0xff]
    %v65 = vld [vmem:[%s1 + $0x78] sm:$0xff]
    %v66 = vld [vmem:[%s2] sm:$0x1]
    %v67 = vld [vmem:[%s3] sm:$0x3]
    %v69 = vperm.slane %v66, 0
    %v103 = vunpack.c.l.b16 %v18
    %v104 = vunpack.c.h.b16 %v18
    %v105 = vunpack.c.l.b16 %v19
    %v106 = vunpack.c.h.b16 %v19
    %v107 = vunpack.c.l.b16 %v20
    %v108 = vunpack.c.h.b16 %v20
    %v109 = vunpack.c.l.b16 %v21
    %v110 = vunpack.c.h.b16 %v21
    %v111 = vunpack.c.l.b16 %v22
    %v112 = vunpack.c.h.b16 %v22
    %v113 = vunpack.c.l.b16 %v23
    %v114 = vunpack.c.h.b16 %v23
    %v115 = vunpack.c.l.b16 %v24
    %v116 = vunpack.c.h.b16 %v24
    %v117 = vunpack.c.l.b16 %v25
    %v118 = vunpack.c.h.b16 %v25
    %v119 = vunpack.c.l.b16 %v26
    %v120 = vunpack.c.h.b16 %v26
    %v121 = vunpack.c.l.b16 %v27
    %v122 = vunpack.c.h.b16 %v27
    %v123 = vunpack.c.l.b16 %v28
    %v124 = vunpack.c.h.b16 %v28
    %v125 = vunpack.c.l.b16 %v29
    %v126 = vunpack.c.h.b16 %v29
    %v127 = vunpack.c.l.b16 %v30
    %v128 = vunpack.c.h.b16 %v30
    %v129 = vunpack.c.l.b16 %v31
    %v130 = vunpack.c.h.b16 %v31
    %v131 = vunpack.c.l.b16 %v32
    %v132 = vunpack.c.h.b16 %v32
    %v133 = vunpack.c.l.b16 %v33
    %v134 = vunpack.c.h.b16 %v33
    %v135 = vunpack.c.l.b16 %v34
    %v136 = vunpack.c.h.b16 %v34
    %v137 = vunpack.c.l.b16 %v35
    %v138 = vunpack.c.h.b16 %v35
    %v139 = vunpack.c.l.b16 %v36
    %v140 = vunpack.c.h.b16 %v36
    %v141 = vunpack.c.l.b16 %v37
    %v142 = vunpack.c.h.b16 %v37
    %v143 = vunpack.c.l.b16 %v38
    %v144 = vunpack.c.h.b16 %v38
    %v145 = vunpack.c.l.b16 %v39
    %v146 = vunpack.c.h.b16 %v39
    %v147 = vunpack.c.l.b16 %v40
    %v148 = vunpack.c.h.b16 %v40
    %v149 = vunpack.c.l.b16 %v41
    %v150 = vunpack.c.h.b16 %v41
    %v151 = vunpack.c.l.b16 %v42
    %v152 = vunpack.c.h.b16 %v42
    %v153 = vunpack.c.l.b16 %v43
    %v154 = vunpack.c.h.b16 %v43
    %v155 = vunpack.c.l.b16 %v44
    %v156 = vunpack.c.h.b16 %v44
    %v157 = vunpack.c.l.b16 %v45
    %v158 = vunpack.c.h.b16 %v45
    %v159 = vunpack.c.l.b16 %v46
    %v160 = vunpack.c.h.b16 %v46
    %v161 = vunpack.c.l.b16 %v47
    %v162 = vunpack.c.h.b16 %v47
    %v163 = vunpack.c.l.b16 %v48
    %v164 = vunpack.c.h.b16 %v48
    %v165 = vunpack.c.l.b16 %v49
    %v166 = vunpack.c.h.b16 %v49
    %v167 = vpack.c.b16 %v105, %v103
    %v168 = vpack.c.b16 %v106, %v104
    %v169 = vpack.c.b16 %v109, %v107
    %v170 = vpack.c.b16 %v110, %v108
    %v171 = vpack.c.b16 %v113, %v111
    %v172 = vpack.c.b16 %v114, %v112
    %v173 = vpack.c.b16 %v117, %v115
    %v174 = vpack.c.b16 %v118, %v116
    %v175 = vpack.c.b16 %v121, %v119
    %v176 = vpack.c.b16 %v122, %v120
    %v177 = vpack.c.b16 %v125, %v123
    %v178 = vpack.c.b16 %v126, %v124
    %v179 = vpack.c.b16 %v129, %v127
    %v180 = vpack.c.b16 %v130, %v128
    %v181 = vpack.c.b16 %v133, %v131
    %v182 = vpack.c.b16 %v134, %v132
    %v183 = vpack.c.b16 %v137, %v135
    %v184 = vpack.c.b16 %v138, %v136
    %v185 = vpack.c.b16 %v141, %v139
    %v186 = vpack.c.b16 %v142, %v140
    %v187 = vpack.c.b16 %v145, %v143
    %v188 = vpack.c.b16 %v146, %v144
    %v189 = vpack.c.b16 %v149, %v147
    %v190 = vpack.c.b16 %v150, %v148
    %v191 = vpack.c.b16 %v153, %v151
    %v192 = vpack.c.b16 %v154, %v152
    %v193 = vpack.c.b16 %v157, %v155
    %v194 = vpack.c.b16 %v158, %v156
    %v195 = vpack.c.b16 %v161, %v159
    %v196 = vpack.c.b16 %v162, %v160
    %v197 = vpack.c.b16 %v165, %v163
    %v198 = vpack.c.b16 %v166, %v164
    %v247 = vunpack.c.l.b16 %v50
    %v248 = vunpack.c.h.b16 %v50
    %v249 = vunpack.c.l.b16 %v51
    %v250 = vunpack.c.h.b16 %v51
    %v251 = vunpack.c.l.b16 %v52
    %v252 = vunpack.c.h.b16 %v52
    %v253 = vunpack.c.l.b16 %v53
    %v254 = vunpack.c.h.b16 %v53
    %v255 = vunpack.c.l.b16 %v54
    %v256 = vunpack.c.h.b16 %v54
    %v257 = vunpack.c.l.b16 %v55
    %v258 = vunpack.c.h.b16 %v55
    %v259 = vunpack.c.l.b16 %v56
    %v260 = vunpack.c.h.b16 %v56
    %v261 = vunpack.c.l.b16 %v57
    %v262 = vunpack.c.h.b16 %v57
    %v263 = vunpack.c.l.b16 %v58
    %v264 = vunpack.c.h.b16 %v58
    %v265 = vunpack.c.l.b16 %v59
    %v266 = vunpack.c.h.b16 %v59
    %v267 = vunpack.c.l.b16 %v60
    %v268 = vunpack.c.h.b16 %v60
    %v269 = vunpack.c.l.b16 %v61
    %v270 = vunpack.c.h.b16 %v61
    %v271 = vunpack.c.l.b16 %v62
    %v272 = vunpack.c.h.b16 %v62
    %v273 = vunpack.c.l.b16 %v63
    %v274 = vunpack.c.h.b16 %v63
    %v275 = vunpack.c.l.b16 %v64
    %v276 = vunpack.c.h.b16 %v64
    %v277 = vunpack.c.l.b16 %v65
    %v278 = vunpack.c.h.b16 %v65
    %v279 = vpack.c.b16 %v249, %v247
    %v280 = vpack.c.b16 %v250, %v248
    %v281 = vpack.c.b16 %v253, %v251
    %v282 = vpack.c.b16 %v254, %v252
    %v283 = vpack.c.b16 %v257, %v255
    %v284 = vpack.c.b16 %v258, %v256
    %v285 = vpack.c.b16 %v261, %v259
    %v286 = vpack.c.b16 %v262, %v260
    %v287 = vpack.c.b16 %v265, %v263
    %v288 = vpack.c.b16 %v266, %v264
    %v289 = vpack.c.b16 %v269, %v267
    %v290 = vpack.c.b16 %v270, %v268
    %v291 = vpack.c.b16 %v273, %v271
    %v292 = vpack.c.b16 %v274, %v272
    %v293 = vpack.c.b16 %v277, %v275
    %v294 = vpack.c.b16 %v278, %v276
    %311 = vmatpush.bf16.xpose.msra.mxu0 %v293
    %312 = vmatpush.bf16.xpose.msra.mxu0 %v291
    %313 = vmatpush.bf16.xpose.msra.mxu0 %v289
    %314 = vmatpush.bf16.xpose.msra.mxu0 %v287
    %315 = vmatpush.bf16.xpose.msra.mxu0 %v285
    %316 = vmatpush.bf16.xpose.msra.mxu0 %v283
    %317 = vmatpush.bf16.xpose.msra.mxu0 %v281
    %318 = vmatpush.bf16.xpose.msra.mxu0 %v279
    %319 = vmatmul.bf16.gmra.mxu0 %v167
    %v320 = vpop.f32.mrf.mxu0
    %v321 = vadd.f32 %v69, %v320
    %v322 = vpop.f32.mrf.mxu0
    %v323 = vadd.f32 %v69, %v322
    %324 = vmatmul.bf16.gmra.mxu0 %v169
    %v325 = vpop.f32.mrf.mxu0
    %v326 = vadd.f32 %v69, %v325
    %v327 = vpop.f32.mrf.mxu0
    %v328 = vadd.f32 %v69, %v327
    %329 = vmatmul.bf16.gmra.mxu0 %v171
    %v330 = vpop.f32.mrf.mxu0
    %v331 = vadd.f32 %v69, %v330
    %v332 = vpop.f32.mrf.mxu0
    %v333 = vadd.f32 %v69, %v332
    %334 = vmatmul.bf16.gmra.mxu0 %v173
    %v335 = vpop.f32.mrf.mxu0
    %v336 = vadd.f32 %v69, %v335
    %v337 = vpop.f32.mrf.mxu0
    %v338 = vadd.f32 %v69, %v337
    %339 = vmatmul.bf16.gmra.mxu0 %v175
    %v340 = vpop.f32.mrf.mxu0
    %v341 = vadd.f32 %v69, %v340
    %v342 = vpop.f32.mrf.mxu0
    %v343 = vadd.f32 %v69, %v342
    %344 = vmatmul.bf16.gmra.mxu0 %v177
    %v345 = vpop.f32.mrf.mxu0
    %v346 = vadd.f32 %v69, %v345
    %v347 = vpop.f32.mrf.mxu0
    %v348 = vadd.f32 %v69, %v347
    %349 = vmatmul.bf16.gmra.mxu0 %v179
    %v350 = vpop.f32.mrf.mxu0
    %v351 = vadd.f32 %v69, %v350
    %v352 = vpop.f32.mrf.mxu0
    %v353 = vadd.f32 %v69, %v352
    %354 = vmatmul.bf16.gmra.mxu0 %v181
    %v355 = vpop.f32.mrf.mxu0
    %v356 = vadd.f32 %v69, %v355
    %v357 = vpop.f32.mrf.mxu0
    %v358 = vadd.f32 %v69, %v357
    %359 = vmatmul.bf16.gmra.mxu0 %v183
    %v360 = vpop.f32.mrf.mxu0
    %v361 = vadd.f32 %v69, %v360
    %v362 = vpop.f32.mrf.mxu0
    %v363 = vadd.f32 %v69, %v362
    %364 = vmatmul.bf16.gmra.mxu0 %v185
    %v365 = vpop.f32.mrf.mxu0
    %v366 = vadd.f32 %v69, %v365
    %v367 = vpop.f32.mrf.mxu0
    %v368 = vadd.f32 %v69, %v367
    %369 = vmatmul.bf16.gmra.mxu0 %v187
    %v370 = vpop.f32.mrf.mxu0
    %v371 = vadd.f32 %v69, %v370
    %v372 = vpop.f32.mrf.mxu0
    %v373 = vadd.f32 %v69, %v372
    %374 = vmatmul.bf16.gmra.mxu0 %v189
    %v375 = vpop.f32.mrf.mxu0
    %v376 = vadd.f32 %v69, %v375
    %v377 = vpop.f32.mrf.mxu0
    %v378 = vadd.f32 %v69, %v377
    %379 = vmatmul.bf16.gmra.mxu0 %v191
    %v380 = vpop.f32.mrf.mxu0
    %v381 = vadd.f32 %v69, %v380
    %v382 = vpop.f32.mrf.mxu0
    %v383 = vadd.f32 %v69, %v382
    %384 = vmatmul.bf16.gmra.mxu0 %v193
    %v385 = vpop.f32.mrf.mxu0
    %v386 = vadd.f32 %v69, %v385
    %v387 = vpop.f32.mrf.mxu0
    %v388 = vadd.f32 %v69, %v387
    %389 = vmatmul.bf16.gmra.mxu0 %v195
    %v390 = vpop.f32.mrf.mxu0
    %v391 = vadd.f32 %v69, %v390
    %v392 = vpop.f32.mrf.mxu0
    %v393 = vadd.f32 %v69, %v392
    %394 = vmatmul.bf16.gmra.mxu0 %v197
    %v395 = vpop.f32.mrf.mxu0
    %v396 = vadd.f32 %v69, %v395
    %v397 = vpop.f32.mrf.mxu0
    %v398 = vadd.f32 %v69, %v397
    %399 = vdwg.mxu0
    %400 = vmatpush.bf16.xpose.msra.mxu0 %v294
    %401 = vmatpush.bf16.xpose.msra.mxu0 %v292
    %402 = vmatpush.bf16.xpose.msra.mxu0 %v290
    %403 = vmatpush.bf16.xpose.msra.mxu0 %v288
    %404 = vmatpush.bf16.xpose.msra.mxu0 %v286
    %405 = vmatpush.bf16.xpose.msra.mxu0 %v284
    %406 = vmatpush.bf16.xpose.msra.mxu0 %v282
    %407 = vmatpush.bf16.xpose.msra.mxu0 %v280
    %408 = vmatmul.bf16.gmra.mxu0 %v168
    %v409 = vpop.f32.mrf.mxu0
    %v410 = vadd.f32 %v321, %v409
    %v411 = vpop.f32.mrf.mxu0
    %v412 = vadd.f32 %v323, %v411
    %413 = vmatmul.bf16.gmra.mxu0 %v170
    %v414 = vpop.f32.mrf.mxu0
    %v415 = vadd.f32 %v326, %v414
    %v416 = vpop.f32.mrf.mxu0
    %v417 = vadd.f32 %v328, %v416
    %418 = vmatmul.bf16.gmra.mxu0 %v172
    %v419 = vpop.f32.mrf.mxu0
    %v420 = vadd.f32 %v331, %v419
    %v421 = vpop.f32.mrf.mxu0
    %v422 = vadd.f32 %v333, %v421
    %423 = vmatmul.bf16.gmra.mxu0 %v174
    %v424 = vpop.f32.mrf.mxu0
    %v425 = vadd.f32 %v336, %v424
    %v426 = vpop.f32.mrf.mxu0
    %v427 = vadd.f32 %v338, %v426
    %428 = vmatmul.bf16.gmra.mxu0 %v176
    %v429 = vpop.f32.mrf.mxu0
    %v430 = vadd.f32 %v341, %v429
    %v431 = vpop.f32.mrf.mxu0
    %v432 = vadd.f32 %v343, %v431
    %433 = vmatmul.bf16.gmra.mxu0 %v178
    %v434 = vpop.f32.mrf.mxu0
    %v435 = vadd.f32 %v346, %v434
    %v436 = vpop.f32.mrf.mxu0
    %v437 = vadd.f32 %v348, %v436
    %438 = vmatmul.bf16.gmra.mxu0 %v180
    %v439 = vpop.f32.mrf.mxu0
    %v440 = vadd.f32 %v351, %v439
    %v441 = vpop.f32.mrf.mxu0
    %v442 = vadd.f32 %v353, %v441
    %443 = vmatmul.bf16.gmra.mxu0 %v182
    %v444 = vpop.f32.mrf.mxu0
    %v445 = vadd.f32 %v356, %v444
    %v446 = vpop.f32.mrf.mxu0
    %v447 = vadd.f32 %v358, %v446
    %448 = vmatmul.bf16.gmra.mxu0 %v184
    %v449 = vpop.f32.mrf.mxu0
    %v450 = vadd.f32 %v361, %v449
    %v451 = vpop.f32.mrf.mxu0
    %v452 = vadd.f32 %v363, %v451
    %453 = vmatmul.bf16.gmra.mxu0 %v186
    %v454 = vpop.f32.mrf.mxu0
    %v455 = vadd.f32 %v366, %v454
    %v456 = vpop.f32.mrf.mxu0
    %v457 = vadd.f32 %v368, %v456
    %458 = vmatmul.bf16.gmra.mxu0 %v188
    %v459 = vpop.f32.mrf.mxu0
    %v460 = vadd.f32 %v371, %v459
    %v461 = vpop.f32.mrf.mxu0
    %v462 = vadd.f32 %v373, %v461
    %463 = vmatmul.bf16.gmra.mxu0 %v190
    %v464 = vpop.f32.mrf.mxu0
    %v465 = vadd.f32 %v376, %v464
    %v466 = vpop.f32.mrf.mxu0
    %v467 = vadd.f32 %v378, %v466
    %468 = vmatmul.bf16.gmra.mxu0 %v192
    %v469 = vpop.f32.mrf.mxu0
    %v470 = vadd.f32 %v381, %v469
    %v471 = vpop.f32.mrf.mxu0
    %v472 = vadd.f32 %v383, %v471
    %473 = vmatmul.bf16.gmra.mxu0 %v194
    %v474 = vpop.f32.mrf.mxu0
    %v475 = vadd.f32 %v386, %v474
    %v476 = vpop.f32.mrf.mxu0
    %v477 = vadd.f32 %v388, %v476
    %478 = vmatmul.bf16.gmra.mxu0 %v196
    %v479 = vpop.f32.mrf.mxu0
    %v480 = vadd.f32 %v391, %v479
    %v481 = vpop.f32.mrf.mxu0
    %v482 = vadd.f32 %v393, %v481
    %483 = vmatmul.bf16.gmra.mxu0 %v198
    %v484 = vpop.f32.mrf.mxu0
    %v485 = vadd.f32 %v396, %v484
    %v486 = vpop.f32.mrf.mxu0
    %v487 = vadd.f32 %v398, %v486
    %488 = vdwg.mxu0
    %v489 = vmax.f32 %v410, 0.0
    %v490 = vmax.f32 %v412, 0.0
    %v491 = vmax.f32 %v415, 0.0
    %v492 = vmax.f32 %v417, 0.0
    %v493 = vmax.f32 %v420, 0.0
    %v494 = vmax.f32 %v422, 0.0
    %v495 = vmax.f32 %v425, 0.0
    %v496 = vmax.f32 %v427, 0.0
    %v497 = vmax.f32 %v430, 0.0
    %v498 = vmax.f32 %v432, 0.0
    %v499 = vmax.f32 %v435, 0.0
    %v500 = vmax.f32 %v437, 0.0
    %v501 = vmax.f32 %v440, 0.0
    %v502 = vmax.f32 %v442, 0.0
    %v503 = vmax.f32 %v445, 0.0
    %v504 = vmax.f32 %v447, 0.0
    %v505 = vmax.f32 %v450, 0.0
    %v506 = vmax.f32 %v452, 0.0
    %v507 = vmax.f32 %v455, 0.0
    %v508 = vmax.f32 %v457, 0.0
    %v509 = vmax.f32 %v460, 0.0
    %v510 = vmax.f32 %v462, 0.0
    %v511 = vmax.f32 %v465, 0.0
    %v512 = vmax.f32 %v467, 0.0
    %v513 = vmax.f32 %v470, 0.0
    %v514 = vmax.f32 %v472, 0.0
    %v515 = vmax.f32 %v475, 0.0
    %v516 = vmax.f32 %v477, 0.0
    %v517 = vmax.f32 %v480, 0.0
    %v518 = vmax.f32 %v482, 0.0
    %v519 = vmax.f32 %v485, 0.0
    %v520 = vmax.f32 %v487, 0.0
    %v521 = vpack.c.bf16 %v490, %v489
    %v522 = vpack.c.bf16 %v492, %v491
    %v523 = vpack.c.bf16 %v494, %v493
    %v524 = vpack.c.bf16 %v496, %v495
    %v525 = vpack.c.bf16 %v498, %v497
    %v526 = vpack.c.bf16 %v500, %v499
    %v527 = vpack.c.bf16 %v502, %v501
    %v528 = vpack.c.bf16 %v504, %v503
    %v529 = vpack.c.bf16 %v506, %v505
    %v530 = vpack.c.bf16 %v508, %v507
    %v531 = vpack.c.bf16 %v510, %v509
    %v532 = vpack.c.bf16 %v512, %v511
    %v533 = vpack.c.bf16 %v514, %v513
    %v534 = vpack.c.bf16 %v516, %v515
    %v535 = vpack.c.bf16 %v518, %v517
    %v536 = vpack.c.bf16 %v520, %v519
    %v538 = vperm.slane %v67, 0
    %v539 = vperm.slane %v67, 1
    %542 = vmatpush.bf16.msra.mxu0 %v293
    %543 = vmatpush.bf16.msra.mxu0 %v291
    %544 = vmatpush.bf16.msra.mxu0 %v289
    %545 = vmatpush.bf16.msra.mxu0 %v287
    %546 = vmatpush.bf16.msra.mxu0 %v285
    %547 = vmatpush.bf16.msra.mxu0 %v283
    %548 = vmatpush.bf16.msra.mxu0 %v281
    %549 = vmatpush.bf16.msra.mxu0 %v279
    %550 = vmatmul.bf16.gmra.mxu0 %v521
    %v551 = vpop.f32.mrf.mxu0
    %v552 = vadd.f32 %v538, %v551
    %v553 = vpop.f32.mrf.mxu0
    %v554 = vadd.f32 %v538, %v553
    %555 = vmatmul.bf16.gmra.mxu0 %v522
    %v556 = vpop.f32.mrf.mxu0
    %v557 = vadd.f32 %v538, %v556
    %v558 = vpop.f32.mrf.mxu0
    %v559 = vadd.f32 %v538, %v558
    %560 = vmatmul.bf16.gmra.mxu0 %v523
    %v561 = vpop.f32.mrf.mxu0
    %v562 = vadd.f32 %v538, %v561
    %v563 = vpop.f32.mrf.mxu0
    %v564 = vadd.f32 %v538, %v563
    %565 = vmatmul.bf16.gmra.mxu0 %v524
    %v566 = vpop.f32.mrf.mxu0
    %v567 = vadd.f32 %v538, %v566
    %v568 = vpop.f32.mrf.mxu0
    %v569 = vadd.f32 %v538, %v568
    %570 = vmatmul.bf16.gmra.mxu0 %v525
    %v571 = vpop.f32.mrf.mxu0
    %v572 = vadd.f32 %v538, %v571
    %v573 = vpop.f32.mrf.mxu0
    %v574 = vadd.f32 %v538, %v573
    %575 = vmatmul.bf16.gmra.mxu0 %v526
    %v576 = vpop.f32.mrf.mxu0
    %v577 = vadd.f32 %v538, %v576
    %v578 = vpop.f32.mrf.mxu0
    %v579 = vadd.f32 %v538, %v578
    %580 = vmatmul.bf16.gmra.mxu0 %v527
    %v581 = vpop.f32.mrf.mxu0
    %v582 = vadd.f32 %v538, %v581
    %v583 = vpop.f32.mrf.mxu0
    %v584 = vadd.f32 %v538, %v583
    %585 = vmatmul.bf16.gmra.mxu0 %v528
    %v586 = vpop.f32.mrf.mxu0
    %v587 = vadd.f32 %v538, %v586
    %v588 = vpop.f32.mrf.mxu0
    %v589 = vadd.f32 %v538, %v588
    %590 = vmatmul.bf16.gmra.mxu0 %v529
    %v591 = vpop.f32.mrf.mxu0
    %v592 = vadd.f32 %v538, %v591
    %v593 = vpop.f32.mrf.mxu0
    %v594 = vadd.f32 %v538, %v593
    %595 = vmatmul.bf16.gmra.mxu0 %v530
    %v596 = vpop.f32.mrf.mxu0
    %v597 = vadd.f32 %v538, %v596
    %v598 = vpop.f32.mrf.mxu0
    %v599 = vadd.f32 %v538, %v598
    %600 = vmatmul.bf16.gmra.mxu0 %v531
    %v601 = vpop.f32.mrf.mxu0
    %v602 = vadd.f32 %v538, %v601
    %v603 = vpop.f32.mrf.mxu0
    %v604 = vadd.f32 %v538, %v603
    %605 = vmatmul.bf16.gmra.mxu0 %v532
    %v606 = vpop.f32.mrf.mxu0
    %v607 = vadd.f32 %v538, %v606
    %v608 = vpop.f32.mrf.mxu0
    %v609 = vadd.f32 %v538, %v608
    %610 = vmatmul.bf16.gmra.mxu0 %v533
    %v611 = vpop.f32.mrf.mxu0
    %v612 = vadd.f32 %v538, %v611
    %v613 = vpop.f32.mrf.mxu0
    %v614 = vadd.f32 %v538, %v613
    %615 = vmatmul.bf16.gmra.mxu0 %v534
    %v616 = vpop.f32.mrf.mxu0
    %v617 = vadd.f32 %v538, %v616
    %v618 = vpop.f32.mrf.mxu0
    %v619 = vadd.f32 %v538, %v618
    %620 = vmatmul.bf16.gmra.mxu0 %v535
    %v621 = vpop.f32.mrf.mxu0
    %v622 = vadd.f32 %v538, %v621
    %v623 = vpop.f32.mrf.mxu0
    %v624 = vadd.f32 %v538, %v623
    %625 = vmatmul.bf16.gmra.mxu0 %v536
    %v626 = vpop.f32.mrf.mxu0
    %v627 = vadd.f32 %v538, %v626
    %v628 = vpop.f32.mrf.mxu0
    %v629 = vadd.f32 %v538, %v628
    %630 = vdwg.mxu0
    %631 = vmatpush.bf16.msra.mxu0 %v294
    %632 = vmatpush.bf16.msra.mxu0 %v292
    %633 = vmatpush.bf16.msra.mxu0 %v290
    %634 = vmatpush.bf16.msra.mxu0 %v288
    %635 = vmatpush.bf16.msra.mxu0 %v286
    %636 = vmatpush.bf16.msra.mxu0 %v284
    %637 = vmatpush.bf16.msra.mxu0 %v282
    %638 = vmatpush.bf16.msra.mxu0 %v280
    %639 = vmatmul.bf16.gmra.mxu0 %v521
    %v640 = vpop.f32.mrf.mxu0
    %v641 = vadd.f32 %v539, %v640
    %v642 = vpop.f32.mrf.mxu0
    %v643 = vadd.f32 %v539, %v642
    %644 = vmatmul.bf16.gmra.mxu0 %v522
    %v645 = vpop.f32.mrf.mxu0
    %v646 = vadd.f32 %v539, %v645
    %v647 = vpop.f32.mrf.mxu0
    %v648 = vadd.f32 %v539, %v647
    %649 = vmatmul.bf16.gmra.mxu0 %v523
    %v650 = vpop.f32.mrf.mxu0
    %v651 = vadd.f32 %v539, %v650
    %v652 = vpop.f32.mrf.mxu0
    %v653 = vadd.f32 %v539, %v652
    %654 = vmatmul.bf16.gmra.mxu0 %v524
    %v655 = vpop.f32.mrf.mxu0
    %v656 = vadd.f32 %v539, %v655
    %v657 = vpop.f32.mrf.mxu0
    %v658 = vadd.f32 %v539, %v657
    %659 = vmatmul.bf16.gmra.mxu0 %v525
    %v660 = vpop.f32.mrf.mxu0
    %v661 = vadd.f32 %v539, %v660
    %v662 = vpop.f32.mrf.mxu0
    %v663 = vadd.f32 %v539, %v662
    %664 = vmatmul.bf16.gmra.mxu0 %v526
    %v665 = vpop.f32.mrf.mxu0
    %v666 = vadd.f32 %v539, %v665
    %v667 = vpop.f32.mrf.mxu0
    %v668 = vadd.f32 %v539, %v667
    %669 = vmatmul.bf16.gmra.mxu0 %v527
    %v670 = vpop.f32.mrf.mxu0
    %v671 = vadd.f32 %v539, %v670
    %v672 = vpop.f32.mrf.mxu0
    %v673 = vadd.f32 %v539, %v672
    %674 = vmatmul.bf16.gmra.mxu0 %v528
    %v675 = vpop.f32.mrf.mxu0
    %v676 = vadd.f32 %v539, %v675
    %v677 = vpop.f32.mrf.mxu0
    %v678 = vadd.f32 %v539, %v677
    %679 = vmatmul.bf16.gmra.mxu0 %v529
    %v680 = vpop.f32.mrf.mxu0
    %v681 = vadd.f32 %v539, %v680
    %v682 = vpop.f32.mrf.mxu0
    %v683 = vadd.f32 %v539, %v682
    %684 = vmatmul.bf16.gmra.mxu0 %v530
    %v685 = vpop.f32.mrf.mxu0
    %v686 = vadd.f32 %v539, %v685
    %v687 = vpop.f32.mrf.mxu0
    %v688 = vadd.f32 %v539, %v687
    %689 = vmatmul.bf16.gmra.mxu0 %v531
    %v690 = vpop.f32.mrf.mxu0
    %v691 = vadd.f32 %v539, %v690
    %v692 = vpop.f32.mrf.mxu0
    %v693 = vadd.f32 %v539, %v692
    %694 = vmatmul.bf16.gmra.mxu0 %v532
    %v695 = vpop.f32.mrf.mxu0
    %v696 = vadd.f32 %v539, %v695
    %v697 = vpop.f32.mrf.mxu0
    %v698 = vadd.f32 %v539, %v697
    %699 = vmatmul.bf16.gmra.mxu0 %v533
    %v700 = vpop.f32.mrf.mxu0
    %v701 = vadd.f32 %v539, %v700
    %v702 = vpop.f32.mrf.mxu0
    %v703 = vadd.f32 %v539, %v702
    %704 = vmatmul.bf16.gmra.mxu0 %v534
    %v705 = vpop.f32.mrf.mxu0
    %v706 = vadd.f32 %v539, %v705
    %v707 = vpop.f32.mrf.mxu0
    %v708 = vadd.f32 %v539, %v707
    %709 = vmatmul.bf16.gmra.mxu0 %v535
    %v710 = vpop.f32.mrf.mxu0
    %v711 = vadd.f32 %v539, %v710
    %v712 = vpop.f32.mrf.mxu0
    %v713 = vadd.f32 %v539, %v712
    %714 = vmatmul.bf16.gmra.mxu0 %v536
    %v715 = vpop.f32.mrf.mxu0
    %v716 = vadd.f32 %v539, %v715
    %v717 = vpop.f32.mrf.mxu0
    %v718 = vadd.f32 %v539, %v717
    %719 = vdwg.mxu0
    %v720 = vsub.f32 0.0, %v552
    %v721 = vsub.f32 0.0, %v641
    %v722 = vsub.f32 0.0, %v554
    %v723 = vsub.f32 0.0, %v643
    %v724 = vsub.f32 0.0, %v557
    %v725 = vsub.f32 0.0, %v646
    %v726 = vsub.f32 0.0, %v559
    %v727 = vsub.f32 0.0, %v648
    %v728 = vsub.f32 0.0, %v562
    %v729 = vsub.f32 0.0, %v651
    %v730 = vsub.f32 0.0, %v564
    %v731 = vsub.f32 0.0, %v653
    %v732 = vsub.f32 0.0, %v567
    %v733 = vsub.f32 0.0, %v656
    %v734 = vsub.f32 0.0, %v569
    %v735 = vsub.f32 0.0, %v658
    %v736 = vsub.f32 0.0, %v572
    %v737 = vsub.f32 0.0, %v661
    %v738 = vsub.f32 0.0, %v574
    %v739 = vsub.f32 0.0, %v663
    %v740 = vsub.f32 0.0, %v577
    %v741 = vsub.f32 0.0, %v666
    %v742 = vsub.f32 0.0, %v579
    %v743 = vsub.f32 0.0, %v668
    %v744 = vsub.f32 0.0, %v582
    %v745 = vsub.f32 0.0, %v671
    %v746 = vsub.f32 0.0, %v584
    %v747 = vsub.f32 0.0, %v673
    %v748 = vsub.f32 0.0, %v587
    %v749 = vsub.f32 0.0, %v676
    %v750 = vsub.f32 0.0, %v589
    %v751 = vsub.f32 0.0, %v678
    %v752 = vsub.f32 0.0, %v592
    %v753 = vsub.f32 0.0, %v681
    %v754 = vsub.f32 0.0, %v594
    %v755 = vsub.f32 0.0, %v683
    %v756 = vsub.f32 0.0, %v597
    %v757 = vsub.f32 0.0, %v686
    %v758 = vsub.f32 0.0, %v599
    %v759 = vsub.f32 0.0, %v688
    %v760 = vsub.f32 0.0, %v602
    %v761 = vsub.f32 0.0, %v691
    %v762 = vsub.f32 0.0, %v604
    %v763 = vsub.f32 0.0, %v693
    %v764 = vsub.f32 0.0, %v607
    %v765 = vsub.f32 0.0, %v696
    %v766 = vsub.f32 0.0, %v609
    %v767 = vsub.f32 0.0, %v698
    %v768 = vsub.f32 0.0, %v612
    %v769 = vsub.f32 0.0, %v701
    %v770 = vsub.f32 0.0, %v614
    %v771 = vsub.f32 0.0, %v703
    %v772 = vsub.f32 0.0, %v617
    %v773 = vsub.f32 0.0, %v706
    %v774 = vsub.f32 0.0, %v619
    %v775 = vsub.f32 0.0, %v708
    %v776 = vsub.f32 0.0, %v622
    %v777 = vsub.f32 0.0, %v711
    %v778 = vsub.f32 0.0, %v624
    %v779 = vsub.f32 0.0, %v713
    %v780 = vsub.f32 0.0, %v627
    %v781 = vsub.f32 0.0, %v716
    %v782 = vsub.f32 0.0, %v629
    %v783 = vsub.f32 0.0, %v718
    %v784 = vmul.f32 %v720, 1.442695
    %v785 = vpow.pop %v784
    %v786 = vmul.f32 %v721, 1.442695
    %v787 = vpow.pop %v786
    %v788 = vmul.f32 %v722, 1.442695
    %v789 = vpow.pop %v788
    %v790 = vmul.f32 %v723, 1.442695
    %v791 = vpow.pop %v790
    %v792 = vmul.f32 %v724, 1.442695
    %v793 = vpow.pop %v792
    %v794 = vmul.f32 %v725, 1.442695
    %v795 = vpow.pop %v794
    %v796 = vmul.f32 %v726, 1.442695
    %v797 = vpow.pop %v796
    %v798 = vmul.f32 %v727, 1.442695
    %v799 = vpow.pop %v798
    %v800 = vmul.f32 %v728, 1.442695
    %v801 = vpow.pop %v800
    %v802 = vmul.f32 %v729, 1.442695
    %v803 = vpow.pop %v802
    %v804 = vmul.f32 %v730, 1.442695
    %v805 = vpow.pop %v804
    %v806 = vmul.f32 %v731, 1.442695
    %v807 = vpow.pop %v806
    %v808 = vmul.f32 %v732, 1.442695
    %v809 = vpow.pop %v808
    %v810 = vmul.f32 %v733, 1.442695
    %v811 = vpow.pop %v810
    %v812 = vmul.f32 %v734, 1.442695
    %v813 = vpow.pop %v812
    %v814 = vmul.f32 %v735, 1.442695
    %v815 = vpow.pop %v814
    %v816 = vmul.f32 %v736, 1.442695
    %v817 = vpow.pop %v816
    %v818 = vmul.f32 %v737, 1.442695
    %v819 = vpow.pop %v818
    %v820 = vmul.f32 %v738, 1.442695
    %v821 = vpow.pop %v820
    %v822 = vmul.f32 %v739, 1.442695
    %v823 = vpow.pop %v822
    %v824 = vmul.f32 %v740, 1.442695
    %v825 = vpow.pop %v824
    %v826 = vmul.f32 %v741, 1.442695
    %v827 = vpow.pop %v826
    %v828 = vmul.f32 %v742, 1.442695
    %v829 = vpow.pop %v828
    %v830 = vmul.f32 %v743, 1.442695
    %v831 = vpow.pop %v830
    %v832 = vmul.f32 %v744, 1.442695
    %v833 = vpow.pop %v832
    %v834 = vmul.f32 %v745, 1.442695
    %v835 = vpow.pop %v834
    %v836 = vmul.f32 %v746, 1.442695
    %v837 = vpow.pop %v836
    %v838 = vmul.f32 %v747, 1.442695
    %v839 = vpow.pop %v838
    %v840 = vmul.f32 %v748, 1.442695
    %v841 = vpow.pop %v840
    %v842 = vmul.f32 %v749, 1.442695
    %v843 = vpow.pop %v842
    %v844 = vmul.f32 %v750, 1.442695
    %v845 = vpow.pop %v844
    %v846 = vmul.f32 %v751, 1.442695
    %v847 = vpow.pop %v846
    %v848 = vmul.f32 %v752, 1.442695
    %v849 = vpow.pop %v848
    %v850 = vmul.f32 %v753, 1.442695
    %v851 = vpow.pop %v850
    %v852 = vmul.f32 %v754, 1.442695
    %v853 = vpow.pop %v852
    %v854 = vmul.f32 %v755, 1.442695
    %v855 = vpow.pop %v854
    %v856 = vmul.f32 %v756, 1.442695
    %v857 = vpow.pop %v856
    %v858 = vmul.f32 %v757, 1.442695
    %v859 = vpow.pop %v858
    %v860 = vmul.f32 %v758, 1.442695
    %v861 = vpow.pop %v860
    %v862 = vmul.f32 %v759, 1.442695
    %v863 = vpow.pop %v862
    %v864 = vmul.f32 %v760, 1.442695
    %v865 = vpow.pop %v864
    %v866 = vmul.f32 %v761, 1.442695
    %v867 = vpow.pop %v866
    %v868 = vmul.f32 %v762, 1.442695
    %v869 = vpow.pop %v868
    %v870 = vmul.f32 %v763, 1.442695
    %v871 = vpow.pop %v870
    %v872 = vmul.f32 %v764, 1.442695
    %v873 = vpow.pop %v872
    %v874 = vmul.f32 %v765, 1.442695
    %v875 = vpow.pop %v874
    %v876 = vmul.f32 %v766, 1.442695
    %v877 = vpow.pop %v876
    %v878 = vmul.f32 %v767, 1.442695
    %v879 = vpow.pop %v878
    %v880 = vmul.f32 %v768, 1.442695
    %v881 = vpow.pop %v880
    %v882 = vmul.f32 %v769, 1.442695
    %v883 = vpow.pop %v882
    %v884 = vmul.f32 %v770, 1.442695
    %v885 = vpow.pop %v884
    %v886 = vmul.f32 %v771, 1.442695
    %v887 = vpow.pop %v886
    %v888 = vmul.f32 %v772, 1.442695
    %v889 = vpow.pop %v888
    %v890 = vmul.f32 %v773, 1.442695
    %v891 = vpow.pop %v890
    %v892 = vmul.f32 %v774, 1.442695
    %v893 = vpow.pop %v892
    %v894 = vmul.f32 %v775, 1.442695
    %v895 = vpow.pop %v894
    %v896 = vmul.f32 %v776, 1.442695
    %v897 = vpow.pop %v896
    %v898 = vmul.f32 %v777, 1.442695
    %v899 = vpow.pop %v898
    %v900 = vmul.f32 %v778, 1.442695
    %v901 = vpow.pop %v900
    %v902 = vmul.f32 %v779, 1.442695
    %v903 = vpow.pop %v902
    %v904 = vmul.f32 %v780, 1.442695
    %v905 = vpow.pop %v904
    %v906 = vmul.f32 %v781, 1.442695
    %v907 = vpow.pop %v906
    %v908 = vmul.f32 %v782, 1.442695
    %v909 = vpow.pop %v908
    %v910 = vmul.f32 %v783, 1.442695
    %v911 = vpow.pop %v910
    %v912 = vadd.f32 %v785, 1.0
    %v913 = vadd.f32 %v787, 1.0
    %v914 = vadd.f32 %v789, 1.0
    %v915 = vadd.f32 %v791, 1.0
    %v916 = vadd.f32 %v793, 1.0
    %v917 = vadd.f32 %v795, 1.0
    %v918 = vadd.f32 %v797, 1.0
    %v919 = vadd.f32 %v799, 1.0
    %v920 = vadd.f32 %v801, 1.0
    %v921 = vadd.f32 %v803, 1.0
    %v922 = vadd.f32 %v805, 1.0
    %v923 = vadd.f32 %v807, 1.0
    %v924 = vadd.f32 %v809, 1.0
    %v925 = vadd.f32 %v811, 1.0
    %v926 = vadd.f32 %v813, 1.0
    %v927 = vadd.f32 %v815, 1.0
    %v928 = vadd.f32 %v817, 1.0
    %v929 = vadd.f32 %v819, 1.0
    %v930 = vadd.f32 %v821, 1.0
    %v931 = vadd.f32 %v823, 1.0
    %v932 = vadd.f32 %v825, 1.0
    %v933 = vadd.f32 %v827, 1.0
    %v934 = vadd.f32 %v829, 1.0
    %v935 = vadd.f32 %v831, 1.0
    %v936 = vadd.f32 %v833, 1.0
    %v937 = vadd.f32 %v835, 1.0
    %v938 = vadd.f32 %v837, 1.0
    %v939 = vadd.f32 %v839, 1.0
    %v940 = vadd.f32 %v841, 1.0
    %v941 = vadd.f32 %v843, 1.0
    %v942 = vadd.f32 %v845, 1.0
    %v943 = vadd.f32 %v847, 1.0
    %v944 = vadd.f32 %v849, 1.0
    %v945 = vadd.f32 %v851, 1.0
    %v946 = vadd.f32 %v853, 1.0
    %v947 = vadd.f32 %v855, 1.0
    %v948 = vadd.f32 %v857, 1.0
    %v949 = vadd.f32 %v859, 1.0
    %v950 = vadd.f32 %v861, 1.0
    %v951 = vadd.f32 %v863, 1.0
    %v952 = vadd.f32 %v865, 1.0
    %v953 = vadd.f32 %v867, 1.0
    %v954 = vadd.f32 %v869, 1.0
    %v955 = vadd.f32 %v871, 1.0
    %v956 = vadd.f32 %v873, 1.0
    %v957 = vadd.f32 %v875, 1.0
    %v958 = vadd.f32 %v877, 1.0
    %v959 = vadd.f32 %v879, 1.0
    %v960 = vadd.f32 %v881, 1.0
    %v961 = vadd.f32 %v883, 1.0
    %v962 = vadd.f32 %v885, 1.0
    %v963 = vadd.f32 %v887, 1.0
    %v964 = vadd.f32 %v889, 1.0
    %v965 = vadd.f32 %v891, 1.0
    %v966 = vadd.f32 %v893, 1.0
    %v967 = vadd.f32 %v895, 1.0
    %v968 = vadd.f32 %v897, 1.0
    %v969 = vadd.f32 %v899, 1.0
    %v970 = vadd.f32 %v901, 1.0
    %v971 = vadd.f32 %v903, 1.0
    %v972 = vadd.f32 %v905, 1.0
    %v973 = vadd.f32 %v907, 1.0
    %v974 = vadd.f32 %v909, 1.0
    %v975 = vadd.f32 %v911, 1.0
    %v976 = vrcp.pop %v912
    %v977 = vrcp.pop %v913
    %v978 = vrcp.pop %v914
    %v979 = vrcp.pop %v915
    %v980 = vrcp.pop %v916
    %v981 = vrcp.pop %v917
    %v982 = vrcp.pop %v918
    %v983 = vrcp.pop %v919
    %v984 = vrcp.pop %v920
    %v985 = vrcp.pop %v921
    %v986 = vrcp.pop %v922
    %v987 = vrcp.pop %v923
    %v988 = vrcp.pop %v924
    %v989 = vrcp.pop %v925
    %v990 = vrcp.pop %v926
    %v991 = vrcp.pop %v927
    %v992 = vrcp.pop %v928
    %v993 = vrcp.pop %v929
    %v994 = vrcp.pop %v930
    %v995 = vrcp.pop %v931
    %v996 = vrcp.pop %v932
    %v997 = vrcp.pop %v933
    %v998 = vrcp.pop %v934
    %v999 = vrcp.pop %v935
    %v1000 = vrcp.pop %v936
    %v1001 = vrcp.pop %v937
    %v1002 = vrcp.pop %v938
    %v1003 = vrcp.pop %v939
    %v1004 = vrcp.pop %v940
    %v1005 = vrcp.pop %v941
    %v1006 = vrcp.pop %v942
    %v1007 = vrcp.pop %v943
    %v1008 = vrcp.pop %v944
    %v1009 = vrcp.pop %v945
    %v1010 = vrcp.pop %v946
    %v1011 = vrcp.pop %v947
    %v1012 = vrcp.pop %v948
    %v1013 = vrcp.pop %v949
    %v1014 = vrcp.pop %v950
    %v1015 = vrcp.pop %v951
    %v1016 = vrcp.pop %v952
    %v1017 = vrcp.pop %v953
    %v1018 = vrcp.pop %v954
    %v1019 = vrcp.pop %v955
    %v1020 = vrcp.pop %v956
    %v1021 = vrcp.pop %v957
    %v1022 = vrcp.pop %v958
    %v1023 = vrcp.pop %v959
    %v1024 = vrcp.pop %v960
    %v1025 = vrcp.pop %v961
    %v1026 = vrcp.pop %v962
    %v1027 = vrcp.pop %v963
    %v1028 = vrcp.pop %v964
    %v1029 = vrcp.pop %v965
    %v1030 = vrcp.pop %v966
    %v1031 = vrcp.pop %v967
    %v1032 = vrcp.pop %v968
    %v1033 = vrcp.pop %v969
    %v1034 = vrcp.pop %v970
    %v1035 = vrcp.pop %v971
    %v1036 = vrcp.pop %v972
    %v1037 = vrcp.pop %v973
    %v1038 = vrcp.pop %v974
    %v1039 = vrcp.pop %v975
    %v1040 = vpack.c.bf16 %v977, %v976
    %v1041 = vpack.c.bf16 %v979, %v978
    %v1042 = vpack.c.bf16 %v981, %v980
    %v1043 = vpack.c.bf16 %v983, %v982
    %v1044 = vpack.c.bf16 %v985, %v984
    %v1045 = vpack.c.bf16 %v987, %v986
    %v1046 = vpack.c.bf16 %v989, %v988
    %v1047 = vpack.c.bf16 %v991, %v990
    %v1048 = vpack.c.bf16 %v993, %v992
    %v1049 = vpack.c.bf16 %v995, %v994
    %v1050 = vpack.c.bf16 %v997, %v996
    %v1051 = vpack.c.bf16 %v999, %v998
    %v1052 = vpack.c.bf16 %v1001, %v1000
    %v1053 = vpack.c.bf16 %v1003, %v1002
    %v1054 = vpack.c.bf16 %v1005, %v1004
    %v1055 = vpack.c.bf16 %v1007, %v1006
    %v1056 = vpack.c.bf16 %v1009, %v1008
    %v1057 = vpack.c.bf16 %v1011, %v1010
    %v1058 = vpack.c.bf16 %v1013, %v1012
    %v1059 = vpack.c.bf16 %v1015, %v1014
    %v1060 = vpack.c.bf16 %v1017, %v1016
    %v1061 = vpack.c.bf16 %v1019, %v1018
    %v1062 = vpack.c.bf16 %v1021, %v1020
    %v1063 = vpack.c.bf16 %v1023, %v1022
    %v1064 = vpack.c.bf16 %v1025, %v1024
    %v1065 = vpack.c.bf16 %v1027, %v1026
    %v1066 = vpack.c.bf16 %v1029, %v1028
    %v1067 = vpack.c.bf16 %v1031, %v1030
    %v1068 = vpack.c.bf16 %v1033, %v1032
    %v1069 = vpack.c.bf16 %v1035, %v1034
    %v1070 = vpack.c.bf16 %v1037, %v1036
    %v1071 = vpack.c.bf16 %v1039, %v1038
    %1072 = vst [vmem:[#allocation2] sm:$0xff] %v1040
    %1073 = vst [vmem:[#allocation2 + $0x8] sm:$0xff] %v1041
    %1074 = vst [vmem:[#allocation2 + $0x10] sm:$0xff] %v1042
    %1075 = vst [vmem:[#allocation2 + $0x18] sm:$0xff] %v1043
    %1076 = vst [vmem:[#allocation2 + $0x20] sm:$0xff] %v1044
    %1077 = vst [vmem:[#allocation2 + $0x28] sm:$0xff] %v1045
    %1078 = vst [vmem:[#allocation2 + $0x30] sm:$0xff] %v1046
    %1079 = vst [vmem:[#allocation2 + $0x38] sm:$0xff] %v1047
    %1080 = vst [vmem:[#allocation2 + $0x40] sm:$0xff] %v1048
    %1081 = vst [vmem:[#allocation2 + $0x48] sm:$0xff] %v1049
    %1082 = vst [vmem:[#allocation2 + $0x50] sm:$0xff] %v1050
    %1083 = vst [vmem:[#allocation2 + $0x58] sm:$0xff] %v1051
    %1084 = vst [vmem:[#allocation2 + $0x60] sm:$0xff] %v1052
    %1085 = vst [vmem:[#allocation2 + $0x68] sm:$0xff] %v1053
    %1086 = vst [vmem:[#allocation2 + $0x70] sm:$0xff] %v1054
    %1087 = vst [vmem:[#allocation2 + $0x78] sm:$0xff] %v1055
    %1088 = vst [vmem:[#allocation2 + $0x80] sm:$0xff] %v1056
    %1089 = vst [vmem:[#allocation2 + $0x88] sm:$0xff] %v1057
    %1090 = vst [vmem:[#allocation2 + $0x90] sm:$0xff] %v1058
    %1091 = vst [vmem:[#allocation2 + $0x98] sm:$0xff] %v1059
    %1092 = vst [vmem:[#allocation2 + $0xa0] sm:$0xff] %v1060
    %1093 = vst [vmem:[#allocation2 + $0xa8] sm:$0xff] %v1061
    %1094 = vst [vmem:[#allocation2 + $0xb0] sm:$0xff] %v1062
    %1095 = vst [vmem:[#allocation2 + $0xb8] sm:$0xff] %v1063
    %1096 = vst [vmem:[#allocation2 + $0xc0] sm:$0xff] %v1064
    %1097 = vst [vmem:[#allocation2 + $0xc8] sm:$0xff] %v1065
    %1098 = vst [vmem:[#allocation2 + $0xd0] sm:$0xff] %v1066
    %1099 = vst [vmem:[#allocation2 + $0xd8] sm:$0xff] %v1067
    %1100 = vst [vmem:[#allocation2 + $0xe0] sm:$0xff] %v1068
    %1101 = vst [vmem:[#allocation2 + $0xe8] sm:$0xff] %v1069
    %1102 = vst [vmem:[#allocation2 + $0xf0] sm:$0xff] %v1070
    %1103 = vst [vmem:[#allocation2 + $0xf8] sm:$0xff] %v1071
    // Predicated region
    $region18: #{autoencoder_forward.1} parent=1 // pred_check
      _
    $region19: #{autoencoder_forward.1} parent=1 // pred_check_branch
      %1105 = sbr.rel (0) target = $region21
    $region20: #{autoencoder_forward.1} parent=1 // pred_region
      %1107 = vsyncadd [#allocation3], 0
      %s1108 = sshll.u32 [#allocation2], 4
      %s1109 = int_to_ptr.vmem [resolvable:$true] %s1108
      %s1110 = sshll.u32 %s4, 4
      %s1111 = int_to_ptr.hbm [resolvable:$true] %s1110
      %1116 = dma.vmem_to_hbm [thread:$0]  %s1109, 4096, %s1111, [#allocation3], 128, 128, 8
    $region21: #{autoencoder_forward.1} parent=1 // pred_fallthru
      _
    // Predicated region
    $region22: #{autoencoder_forward.1} parent=1 // pred_check
      _
    $region23: #{autoencoder_forward.1} parent=1 // pred_check_branch
      %1118 = sbr.rel (0) target = $region25
    $region24: #{autoencoder_forward.1} parent=1 // pred_region
      %1120 = dma.done [#allocation3], 4096
    $region25: #{autoencoder_forward.1} parent=1 // pred_fallthru
      _
    %1121 = vsyncpa [#allocation3], 1

</llo_original>
